<compile_context>
chip_gen: v7x
topology: tpu7x:2x2x1
jax: 0.10.0
libtpu: 0.0.40
codegen_flags: <defaults>
</compile_context>

<pallas_src>
import functools
import math

import jax
import jax.numpy as jnp
from jax.experimental import pallas as pl
from jax.experimental.pallas import tpu as pltpu

GAMMA = 1e-10
LANE = 128      # vreg lane width
SUBLANE = 8     # vreg sublane count (f32)

# Contribution of one zero-padded element: diff = 0 -> sigmoid = 0.5.
_PAD_TERM = -math.log(GAMMA + 0.5)


def _cdiv(a, b):
    return -(-a // b)


def _round_up(a, b):
    return _cdiv(a, b) * b


def _num_tensorcores():
    """Best-effort TensorCore count (v7x: 2, v5e/v6e: 1). Falls back to 1."""
    try:
        info = pltpu.get_tpu_info()
        for name in ("num_cores", "core_count", "num_tensorcores",
                     "tensorcore_count"):
            v = getattr(info, name, None)
            if isinstance(v, int) and v >= 1:
                return v
    except Exception:
        pass
    try:
        dev = jax.devices()[0]
        for name in ("num_cores", "core_count"):
            v = getattr(dev, name, None)
            if isinstance(v, int) and v >= 1:
                return v
    except Exception:
        pass
    return 1


def _bpr_term(pos, neg):
    """-log(gamma + sigmoid(pos - neg)), sigmoid via tanh (matches kernel)."""
    d = pos.astype(jnp.float32) - neg.astype(jnp.float32)
    return -jnp.log(GAMMA + (0.5 + 0.5 * jnp.tanh(0.5 * d)))


def _bpr_kernel(pos_ref, neg_ref, out_ref):
    """Accumulates sum(-log(gamma + sigmoid(pos-neg))) into a (1,8,128) block.

    Grid = (n_splits [parallel], tiles_per_split [reduction]).  The output
    block index depends only on the split axis, so it stays VMEM-resident
    across the whole reduction axis and acts as the per-split accumulator
    (one vreg wide -> per-tile reduce is pure VPU work, no XLU / scalar
    round-trip in the hot loop).
    """
    i = pl.program_id(1)  # reduction axis

    @pl.when(i == 0)
    def _():
        out_ref[...] = jnp.zeros_like(out_ref)

    diff = pos_ref[...].astype(jnp.float32) - neg_ref[...].astype(jnp.float32)
    # sigmoid(d) = 0.5*tanh(d/2) + 0.5  -> one EUP transcendental instead of
    # exp + reciprocal; the +GAMMA and log are kept exactly as in the module.
    val = -jnp.log(GAMMA + (0.5 + 0.5 * jnp.tanh(0.5 * diff)))

    # Tile-local reduction to one vreg: (R,128) -> (R/8, 8, 128) -> (8,128).
    rows = val.shape[0]
    partial = val.reshape(rows // SUBLANE, SUBLANE, LANE).sum(axis=0)
    out_ref[...] += partial[None, :, :]


@functools.partial(
    jax.jit,
    static_argnames=("rows_per_tile", "num_splits", "use_core_parallel"))
def bpr_loss(pos_score, neg_score, *, rows_per_tile=4096, num_splits=None,
             use_core_parallel=False):
    """-mean(log(gamma + sigmoid(pos - neg))) via a tiled Pallas TPU kernel.

    pos_score / neg_score: matching shapes, f32 or bf16 (any rank).
    rows_per_tile: rows of 128 lanes per grid step (4096 -> 2 MiB f32 tile;
                   safe for v5e's 16 MiB default scoped VMEM and v7x's
                   64 MiB physical VMEM).
    num_splits:    leading grid axis; None -> detected TensorCore count.
    use_core_parallel: opt-in pltpu.CORE_PARALLEL leading axis for v7x.
    """
    assert pos_score.shape == neg_score.shape
    total = pos_score.size
    itemsize = jnp.dtype(pos_score.dtype).itemsize

    pos_flat = pos_score.reshape(-1)
    neg_flat = neg_score.reshape(-1)

    if num_splits is None:
        num_splits = _num_tensorcores()
    num_splits = max(1, int(num_splits))

    # --- static tiling math (all Python ints) --------------------------------
    rows_full = total // LANE                         # rows that fill a lane
    aligned_rows = (rows_full // SUBLANE) * SUBLANE   # sublane-aligned rows
    rpt = _round_up(max(int(rows_per_tile), SUBLANE), SUBLANE)

    pad = 0
    if aligned_rows == 0:
        # Tiny input (< 1024 elements): pad up to one (8,128) tile.  Each
        # padded zero contributes the constant _PAD_TERM, subtracted below.
        pad = SUBLANE * LANE - total
        pos2d = jnp.pad(pos_flat, (0, pad)).reshape(SUBLANE, LANE)
        neg2d = jnp.pad(neg_flat, (0, pad)).reshape(SUBLANE, LANE)
        rpt_eff, tiles_per_split, n_splits = SUBLANE, 1, 1
        main_elems = total
    else:
        rpt_eff = min(rpt, aligned_rows)              # multiple of 8
        tiles = aligned_rows // rpt_eff
        n_splits = num_splits if tiles >= num_splits else 1
        tiles_per_split = tiles // n_splits
        main_rows = n_splits * tiles_per_split * rpt_eff
        main_elems = main_rows * LANE
        # Lane-dense 2-D view of the lane-aligned prefix.  No full-array
        # jnp.pad copy: when total % 128 == 0 the slice is the identity and
        # the reshape is free.  The grid below only touches the first
        # main_rows rows; the leftover (< a couple of tiles) is reduced with
        # a tiny XLA op after the call.
        pos2d = pos_flat[: rows_full * LANE].reshape(rows_full, LANE)
        neg2d = neg_flat[: rows_full * LANE].reshape(rows_full, LANE)

    main_proc = n_splits * tiles_per_split * rpt_eff * LANE  # elems kernel sees

    if use_core_parallel and n_splits > 1:
        dim_sems = (pltpu.CORE_PARALLEL, pltpu.ARBITRARY)   # v7x opt-in
    else:
        dim_sems = ("parallel", "arbitrary")

    in_map = lambda s, i: (s * tiles_per_split + i, 0)

    partials = pl.pallas_call(
        _bpr_kernel,
        out_shape=jax.ShapeDtypeStruct((n_splits, SUBLANE, LANE), jnp.float32),
        grid_spec=pltpu.PrefetchScalarGridSpec(
            num_scalar_prefetch=0,
            grid=(n_splits, tiles_per_split),
            in_specs=[
                pl.BlockSpec((rpt_eff, LANE), in_map),
                pl.BlockSpec((rpt_eff, LANE), in_map),
            ],
            # One lane-dense (8,128) partial-sum slab per split; block index
            # is constant along the reduction axis -> resident accumulator.
            out_specs=pl.BlockSpec((1, SUBLANE, LANE), lambda s, i: (s, 0, 0)),
        ),
        compiler_params=pltpu.CompilerParams(
            dimension_semantics=dim_sems,
            vmem_limit_bytes=32 * 1024 * 1024,
        ),
        cost_estimate=pl.CostEstimate(
            flops=7 * main_proc,
            transcendentals=2 * main_proc,
            bytes_accessed=2 * main_proc * itemsize
            + n_splits * SUBLANE * LANE * 4,
        ),
    )(pos2d, neg2d)

    # Final cross-split / cross-lane reduce + corrections + mean (tiny; XLA).
    loss_sum = partials.sum()
    if pad:
        loss_sum = loss_sum - jnp.float32(pad * _PAD_TERM)
    tail = total - main_elems
    if tail:
        loss_sum = loss_sum + jnp.sum(
            _bpr_term(pos_flat[main_elems:], neg_flat[main_elems:]))
    return loss_sum / jnp.float32(total)


if __name__ == "__main__":
    key = jax.random.PRNGKey(0)
    k1, k2, k3, k4, k5, k6 = jax.random.split(key, 6)

    def ref_loss(p, n):
        d = p.astype(jnp.float32) - n.astype(jnp.float32)
        return -jnp.mean(jnp.log(GAMMA + jax.nn.sigmoid(d)))

    # Small FPMC-like ranking batch: 32 users x 128 sampled item-score pairs.
    pos = jax.random.normal(k1, (32, 128), dtype=jnp.float32)
    neg = jax.random.normal(k2, (32, 128), dtype=jnp.float32)
    out = bpr_loss(pos, neg)
    jax.block_until_ready(out)
    assert jnp.allclose(out, ref_loss(pos, neg), rtol=1e-4, atol=1e-6)

    # Non-lane-aligned medium shape: exercises the aligned-prefix grid plus
    # the small XLA tail (no full-array padding copy).
    pos_m = jax.random.normal(k3, (1000, 300), dtype=jnp.float32)
    neg_m = jax.random.normal(k4, (1000, 300), dtype=jnp.float32)
    out_m = bpr_loss(pos_m, neg_m)
    jax.block_until_ready(out_m)
    assert jnp.allclose(out_m, ref_loss(pos_m, neg_m), rtol=1e-4, atol=1e-6)

    # bf16 inputs accepted directly (half HBM traffic); accumulation is f32.
    pos_b = pos_m.astype(jnp.bfloat16)
    neg_b = neg_m.astype(jnp.bfloat16)
    out_b = bpr_loss(pos_b, neg_b)
    jax.block_until_ready(out_b)
    assert jnp.allclose(out_b, ref_loss(pos_b, neg_b), rtol=1e-4, atol=1e-6)

    # Multi-split resident-accumulator path (what v7x's two TCs would use).
    pos_s = jax.random.normal(k5, (64, 128), dtype=jnp.float32)
    neg_s = jax.random.normal(k6, (64, 128), dtype=jnp.float32)
    out_s = bpr_loss(pos_s, neg_s, rows_per_tile=16, num_splits=2)
    jax.block_until_ready(out_s)
    assert jnp.allclose(out_s, ref_loss(pos_s, neg_s), rtol=1e-4, atol=1e-6)

    # Tiny input: single padded tile + constant pad correction.
    pos_t = jax.random.normal(k1, (5, 7), dtype=jnp.float32)
    neg_t = jax.random.normal(k2, (5, 7), dtype=jnp.float32)
    out_t = bpr_loss(pos_t, neg_t)
    jax.block_until_ready(out_t)
    assert jnp.allclose(out_t, ref_loss(pos_t, neg_t), rtol=1e-4, atol=1e-6)

    print("KERNEL_OK")
</pallas_src>

<mosaic_0001>
module attributes {stable_mosaic.version = 11 : i64} {
  func.func @_bpr_kernel(%arg0: i32, %arg1: i32, %arg2: memref<32x128xf32, #tpu.memory_space<vmem>>, %arg3: memref<32x128xf32, #tpu.memory_space<vmem>>, %arg4: memref<1x8x128xf32, #tpu.memory_space<vmem>>) attributes {dimension_semantics = [#tpu.dimension_semantics<parallel>, #tpu.dimension_semantics<arbitrary>], iteration_bounds = array<i64: 1, 1>, scalar_prefetch = 0 : i64, scratch_operands = 0 : i64, tpu.core_type = #tpu.core_type<tc>, window_params = [{transform_indices = @transform_0, window_bounds = array<i64: 32, 128>}, {transform_indices = @transform_1, window_bounds = array<i64: 32, 128>}, {transform_indices = @transform_2, window_bounds = array<i64: 1, 8, 128>}]} {
    %c0_i32 = arith.constant 0 : i32
    %0 = arith.cmpi eq, %arg1, %c0_i32 : i32
    %1 = arith.extui %0 : i1 to i32
    %c0_i32_0 = arith.constant 0 : i32
    %2 = arith.cmpi ne, %1, %c0_i32_0 : i32
    scf.if %2 {
      %cst_15 = arith.constant 0.000000e+00 : f32
      %24 = vector.broadcast %cst_15 : f32 to vector<1x8x128xf32>
      %c0_16 = arith.constant 0 : index
      %c0_17 = arith.constant 0 : index
      %c0_18 = arith.constant 0 : index
      %25 = vector.load %arg4[%c0_16, %c0_17, %c0_18] : memref<1x8x128xf32, #tpu.memory_space<vmem>>, vector<1x8x128xf32>
      tpu.vector_store %arg4[%c0_16, %c0_17, %c0_18], %24 {strides = array<i32>} : memref<1x8x128xf32, #tpu.memory_space<vmem>>, vector<1x8x128xf32>,
    } else {
    }
    %c0 = arith.constant 0 : index
    %c0_1 = arith.constant 0 : index
    %3 = vector.load %arg2[%c0, %c0_1] : memref<32x128xf32, #tpu.memory_space<vmem>>, vector<32x128xf32>
    %c0_2 = arith.constant 0 : index
    %c0_3 = arith.constant 0 : index
    %4 = vector.load %arg3[%c0_2, %c0_3] : memref<32x128xf32, #tpu.memory_space<vmem>>, vector<32x128xf32>
    %5 = arith.subf %3, %4 : vector<32x128xf32>
    %cst = arith.constant 5.000000e-01 : f32
    %6 = vector.broadcast %cst : f32 to vector<32x128xf32>
    %7 = arith.mulf %6, %5 : vector<32x128xf32>
    %8 = math.tanh %7 : vector<32x128xf32>
    %cst_4 = arith.constant 5.000000e-01 : f32
    %9 = vector.broadcast %cst_4 : f32 to vector<32x128xf32>
    %10 = arith.mulf %9, %8 : vector<32x128xf32>
    %cst_5 = arith.constant 5.000000e-01 : f32
    %11 = vector.broadcast %cst_5 : f32 to vector<32x128xf32>
    %12 = arith.addf %11, %10 : vector<32x128xf32>
    %cst_6 = arith.constant 1.000000e-10 : f32
    %13 = vector.broadcast %cst_6 : f32 to vector<32x128xf32>
    %14 = arith.addf %13, %12 : vector<32x128xf32>
    %15 = math.log %14 : vector<32x128xf32>
    %cst_7 = arith.constant 0.000000e+00 : f32
    %16 = vector.broadcast %cst_7 : f32 to vector<32x128xf32>
    %17 = arith.subf %16, %15 : vector<32x128xf32>
    %18 = vector.shape_cast %17 : vector<32x128xf32> to vector<4x8x128xf32>
    %cst_8 = arith.constant dense<0.000000e+00> : vector<8x128xf32>
    %19 = vector.multi_reduction <add>, %18, %cst_8 [0] : vector<4x8x128xf32> to vector<8x128xf32>
    %c0_9 = arith.constant 0 : index
    %c0_10 = arith.constant 0 : index
    %c0_11 = arith.constant 0 : index
    %20 = vector.load %arg4[%c0_9, %c0_10, %c0_11] : memref<1x8x128xf32, #tpu.memory_space<vmem>>, vector<1x8x128xf32>
    %21 = vector.shape_cast %19 : vector<8x128xf32> to vector<1x8x128xf32>
    %22 = arith.addf %20, %21 : vector<1x8x128xf32>
    %c0_12 = arith.constant 0 : index
    %c0_13 = arith.constant 0 : index
    %c0_14 = arith.constant 0 : index
    %23 = vector.load %arg4[%c0_12, %c0_13, %c0_14] : memref<1x8x128xf32, #tpu.memory_space<vmem>>, vector<1x8x128xf32>
    tpu.vector_store %arg4[%c0_12, %c0_13, %c0_14], %22 {strides = array<i32>} : memref<1x8x128xf32, #tpu.memory_space<vmem>>, vector<1x8x128xf32>,
    return
  }
  func.func @transform_0(%arg0: i32, %arg1: i32) -> (i32, i32) {
    %c1_i32 = arith.constant 1 : i32
    %0 = arith.muli %arg0, %c1_i32 : i32
    %1 = arith.addi %0, %arg1 : i32
    %c0_i32 = arith.constant 0 : i32
    %c0_i32_0 = arith.constant 0 : i32
    return %1, %c0_i32 : i32, i32
  }
  func.func @transform_1(%arg0: i32, %arg1: i32) -> (i32, i32) {
    %c1_i32 = arith.constant 1 : i32
    %0 = arith.muli %arg0, %c1_i32 : i32
    %1 = arith.addi %0, %arg1 : i32
    %c0_i32 = arith.constant 0 : i32
    %c0_i32_0 = arith.constant 0 : i32
    return %1, %c0_i32 : i32, i32
  }
  func.func @transform_2(%arg0: i32, %arg1: i32) -> (i32, i32, i32) {
    %c0_i32 = arith.constant 0 : i32
    %c0_i32_0 = arith.constant 0 : i32
    %c0_i32_1 = arith.constant 0 : i32
    return %arg0, %c0_i32, %c0_i32_0 : i32, i32, i32
  }
}

</mosaic_0001>

<llo_original>
// kernel: bpr_loss.1
$region0: #{bpr_loss.1}
  #allocation0 [shape = 'u32[]', space=smem, size = 0x4, offset = 0x4, fixed_abs, tag = 'smem constant byte address 0x4 - core index']
  #allocation1 [shape = 'u32[144,128]{1,0:T(1,128)}', space=vmem, size = 0x12000, scoped, tag = 'internal scratch']
  %s0 = inlined_call_operand.hbm [shape: f32[32,128], index: 0, kind: input, shape index: {}]
  %s1 = inlined_call_operand.hbm [shape: f32[32,128], index: 1, kind: input, shape index: {}]
  %s2 = inlined_call_operand.vmem [shape: f32[1,8,128], index: 2, kind: output, shape index: {}]
  %s3 = sld [smem:[#allocation0]]
  $region30: #{bpr_loss.1} parent=0
    _
  %s5 = ssub.s32 1, %s3
  %s6 = scalar_select 0, %s5, %s3
  $region1: #{bpr_loss.1} parent=0
    #allocation2 [shape = 'u8[16384]{0}', space=vmem, size = 0x4000, scoped, tag = 'input window, operand 0, single buffered']
    #allocation3 [shape = 's32[1]{0}', space=sflag, size = 0x4, scoped, tag = 'scoped memory for bpr_loss.1']
    #allocation4 [shape = 'u8[16384]{0}', space=vmem, size = 0x4000, scoped, tag = 'input window, operand 1, single buffered']
    #allocation5 [shape = 's32[1]{0}', space=sflag, size = 0x4, scoped, tag = 'scoped memory for bpr_loss.1']
    %7 = vsyncpa [#allocation3], 0
    %8 = vsyncpa [#allocation5], 0
    // Predicated region
    $region2: #{bpr_loss.1} parent=1 // pred_check
      _
    $region3: #{bpr_loss.1} parent=1 // pred_check_branch
      %10 = sbr.rel (0) target = $region5
    $region4: #{bpr_loss.1} parent=1 // pred_region
      %s11 = sadd.s32 0, 0
      %s12 = smul.u32 4, %s11
      %s14 = ssub.s32 512, 512
      %15 = vsyncadd [#allocation3], %s14
      %s16 = smul.addr %s12, 128
      %s17 = scalar_lea.hbm %s0, %s16
      %s18 = sshll.u32 [#allocation2], 4
      %s19 = int_to_ptr.vmem [resolvable:$true] %s18
      %24 = dma.hbm_to_vmem [thread:$0]  %s17, 512, %s19, [#allocation3], 128, 128, 8
    $region5: #{bpr_loss.1} parent=1 // pred_fallthru
      _
    // Predicated region
    $region6: #{bpr_loss.1} parent=1 // pred_check
      _
    $region7: #{bpr_loss.1} parent=1 // pred_check_branch
      %26 = sbr.rel (0) target = $region9
    $region8: #{bpr_loss.1} parent=1 // pred_region
      %s27 = sadd.s32 0, 0
      %s28 = smul.u32 4, %s27
      %s30 = ssub.s32 512, 512
      %31 = vsyncadd [#allocation5], %s30
      %s32 = smul.addr %s28, 128
      %s33 = scalar_lea.hbm %s1, %s32
      %s34 = sshll.u32 [#allocation4], 4
      %s35 = int_to_ptr.vmem [resolvable:$true] %s34
      %40 = dma.hbm_to_vmem [thread:$0]  %s33, 512, %s35, [#allocation5], 128, 128, 8
    $region9: #{bpr_loss.1} parent=1 // pred_fallthru
      _
    // Predicated region
    $region10: #{bpr_loss.1} parent=1 // pred_check
      _
    $region11: #{bpr_loss.1} parent=1 // pred_check_branch
      %42 = sbr.rel (0) target = $region13
    $region12: #{bpr_loss.1} parent=1 // pred_region
      %43 = dma.done [#allocation3], 512
    $region13: #{bpr_loss.1} parent=1 // pred_fallthru
      _
    // Predicated region
    $region14: #{bpr_loss.1} parent=1 // pred_check
      _
    $region15: #{bpr_loss.1} parent=1 // pred_check_branch
      %45 = sbr.rel (0) target = $region17
    $region16: #{bpr_loss.1} parent=1 // pred_region
      %46 = dma.done [#allocation5], 512
    $region17: #{bpr_loss.1} parent=1 // pred_fallthru
      _
    %s47 = sadd.s32 0, 0
    %s48 = smul.u32 4, %s47
    %s49 = sadd.s32 0, 0
    %s50 = smul.u32 4, %s49
    %p51 = scmp.eq.s32.totalorder 0, 0
    // Predicated region
    $region18: #{bpr_loss.1} parent=1 // pred_check
      %p52 = pneg %p51
    $region19: #{bpr_loss.1} parent=1 // pred_check_branch
      %54 = sbr.rel (%p52) target = $region21
    $region20: #{bpr_loss.1} parent=1 // pred_region
      %55 = vst [vmem:[%s2] sm:$0xff] 0.0
    $region21: #{bpr_loss.1} parent=1 // pred_fallthru
      _
    %v56 = vld [vmem:[#allocation2] sm:$0xff]
    %v57 = vld [vmem:[#allocation2 + $0x8] sm:$0xff]
    %v58 = vld [vmem:[#allocation2 + $0x10] sm:$0xff]
    %v59 = vld [vmem:[#allocation2 + $0x18] sm:$0xff]
    %v60 = vld [vmem:[#allocation4] sm:$0xff]
    %v61 = vld [vmem:[#allocation4 + $0x8] sm:$0xff]
    %v62 = vld [vmem:[#allocation4 + $0x10] sm:$0xff]
    %v63 = vld [vmem:[#allocation4 + $0x18] sm:$0xff]
    %v64 = vsub.f32 %v56, %v60
    %v65 = vsub.f32 %v57, %v61
    %v66 = vsub.f32 %v58, %v62
    %v67 = vsub.f32 %v59, %v63
    %v68 = vmul.f32 %v64, 0.5
    %v69 = vmul.f32 %v65, 0.5
    %v70 = vmul.f32 %v66, 0.5
    %v71 = vmul.f32 %v67, 0.5
    %v72 = vtanh.pop %v68
    %v73 = vtanh.pop %v69
    %v74 = vtanh.pop %v70
    %v75 = vtanh.pop %v71
    %v76 = vmul.f32 %v72, 0.5
    %v77 = vmul.f32 %v73, 0.5
    %v78 = vmul.f32 %v74, 0.5
    %v79 = vmul.f32 %v75, 0.5
    %v80 = vadd.f32 %v76, 0.5
    %v81 = vadd.f32 %v77, 0.5
    %v82 = vadd.f32 %v78, 0.5
    %v83 = vadd.f32 %v79, 0.5
    %v84 = vadd.f32 %v80, 1e-10
    %v85 = vadd.f32 %v81, 1e-10
    %v86 = vadd.f32 %v82, 1e-10
    %v87 = vadd.f32 %v83, 1e-10
    %v88 = vlog2.pop %v84
    %v89 = vmul.f32 %v88, 0.6931472
    %v90 = vlog2.pop %v85
    %v91 = vmul.f32 %v90, 0.6931472
    %v92 = vlog2.pop %v86
    %v93 = vmul.f32 %v92, 0.6931472
    %v94 = vlog2.pop %v87
    %v95 = vmul.f32 %v94, 0.6931472
    %v96 = vsub.f32 0.0, %v89
    %v97 = vsub.f32 0.0, %v91
    %v98 = vsub.f32 0.0, %v93
    %v99 = vsub.f32 0.0, %v95
    %v100 = vadd.f32 %v96, %v97
    %v101 = vadd.f32 %v100, %v98
    %v102 = vadd.f32 %v101, %v99
    %v103 = vld [vmem:[%s2] sm:$0xff]
    %v104 = vadd.f32 %v103, %v102
    %105 = vst [vmem:[%s2] sm:$0xff] %v104
    // Predicated region
    $region22: #{bpr_loss.1} parent=1 // pred_check
      _
    $region23: #{bpr_loss.1} parent=1 // pred_check_branch
      %107 = sbr.rel (0) target = $region25
    $region24: #{bpr_loss.1} parent=1 // pred_region
      _
    $region25: #{bpr_loss.1} parent=1 // pred_fallthru
      _
    // Predicated region
    $region26: #{bpr_loss.1} parent=1 // pred_check
      _
    $region27: #{bpr_loss.1} parent=1 // pred_check_branch
      %109 = sbr.rel (0) target = $region29
    $region28: #{bpr_loss.1} parent=1 // pred_region
      _
    $region29: #{bpr_loss.1} parent=1 // pred_fallthru
      _
    %110 = vsyncpa [#allocation3], 1
    %111 = vsyncpa [#allocation5], 1

</llo_original>
